<compile_context>
chip_gen: v6e
topology: v6e:2x2x1
jax: 0.10.0
libtpu: 0.0.40
codegen_flags: <defaults>
</compile_context>

<pallas_src>
import functools

import jax
import jax.numpy as jnp
from jax import lax
from jax.experimental import pallas as pl
from jax.experimental.pallas import tpu as pltpu


_MAX_TM = 512                       # row-tile cap (v7x-safe; could be 1024 on v5e/v6e)
_VMEM_LIMIT = 64 * 1024 * 1024      # <= physical VMEM on v5e/v6e/v7x


# ----------------------------- Pallas kernels ------------------------------ #

def _ln_linear_kernel(x_ref, g_ref, b_ref, w_ref, bias_ref, o_ref, *, eps):
    """Fused LayerNorm (f32) -> bf16 matmul (f32 acc) -> bias."""
    x = x_ref[...].astype(jnp.float32)
    mu = jnp.mean(x, axis=-1, keepdims=True)
    var = jnp.mean((x - mu) ** 2, axis=-1, keepdims=True)
    h = (x - mu) * lax.rsqrt(var + eps)
    h = h * g_ref[...].astype(jnp.float32) + b_ref[...].astype(jnp.float32)
    y = jnp.dot(h.astype(jnp.bfloat16), w_ref[...],
                preferred_element_type=jnp.float32)
    y = y + bias_ref[...].astype(jnp.float32)
    o_ref[...] = y.astype(o_ref.dtype)


def _ln_mlp_residual_kernel(x_ref, g_ref, b_ref, w1_ref, b1_ref, w2_ref, b2_ref,
                            o_ref, *, eps):
    """Fused MLP block: LN -> W1 -> quick-gelu -> W2 -> bias -> +residual.

    Both weights are resident (constant index_map); the (tm, D_MLP) intermediate
    never leaves VMEM.
    """
    x = x_ref[...].astype(jnp.float32)
    mu = jnp.mean(x, axis=-1, keepdims=True)
    var = jnp.mean((x - mu) ** 2, axis=-1, keepdims=True)
    h = (x - mu) * lax.rsqrt(var + eps)
    h = h * g_ref[...].astype(jnp.float32) + b_ref[...].astype(jnp.float32)
    u = jnp.dot(h.astype(jnp.bfloat16), w1_ref[...],
                preferred_element_type=jnp.float32)
    u = u + b1_ref[...].astype(jnp.float32)
    u = u * jax.nn.sigmoid(1.702 * u)                 # CLIP quick-gelu
    y = jnp.dot(u.astype(jnp.bfloat16), w2_ref[...],
                preferred_element_type=jnp.float32)
    y = y + b2_ref[...].astype(jnp.float32) + x       # residual = pre-LN input
    o_ref[...] = y.astype(o_ref.dtype)


def _attn_outproj_kernel(qkv_ref, wo_ref, bo_ref, res_ref, o_ref, acc_ref, *,
                         heads_per_group, dh, scale):
    """Causal MHA for one batch element / one head-group, fused with out-proj+residual.

    qkv_ref block: (1, S, 3*hg*dh) packed as [Q_group | K_group | V_group].
    wo_ref block:  (hg*dh, D) rows of the output projection for this head group.
    Accumulates residual + bo + sum_h (attn_h @ Wo_h) in an f32 VMEM scratch; the
    bf16 (1, S, D) output is stored once on the last group ("arbitrary" grid axis).
    """
    g = pl.program_id(1)

    @pl.when(g == 0)
    def _():
        acc_ref[...] = (res_ref[...].astype(jnp.float32)
                        + bo_ref[...].astype(jnp.float32))

    qkv = qkv_ref[0]                                  # (S, 3*hg*dh) bf16
    S = qkv.shape[0]
    D = acc_ref.shape[2]
    hw = heads_per_group * dh
    q = qkv[:, 0:hw]
    k = qkv[:, hw:2 * hw]
    v = qkv[:, 2 * hw:3 * hw]
    wo = wo_ref[...]                                  # (hw, D) bf16

    # In-kernel causal mask (no HBM mask buffer).
    row = lax.broadcasted_iota(jnp.int32, (S, S), 0)
    col = lax.broadcasted_iota(jnp.int32, (S, S), 1)
    causal = col <= row

    contrib = jnp.zeros((S, D), jnp.float32)
    for h in range(heads_per_group):                  # static, small loop
        qh = q[:, h * dh:(h + 1) * dh]
        kh = k[:, h * dh:(h + 1) * dh]
        vh = v[:, h * dh:(h + 1) * dh]
        # q k^T without materializing kh.T (contraction on last dims -> MXU).
        s = lax.dot_general(qh, kh, dimension_numbers=(((1,), (1,)), ((), ())),
                            preferred_element_type=jnp.float32) * scale
        s = jnp.where(causal, s, -1e9)                # f32 scores -> -1e9 is safe
        s = s - jnp.max(s, axis=-1, keepdims=True)
        p = jnp.exp(s)
        p = p * pl.reciprocal(jnp.sum(p, axis=-1, keepdims=True), approx=True)
        oh = jnp.dot(p.astype(jnp.bfloat16), vh,
                     preferred_element_type=jnp.float32)          # (S, dh)
        contrib = contrib + jnp.dot(oh.astype(jnp.bfloat16),
                                    wo[h * dh:(h + 1) * dh, :],
                                    preferred_element_type=jnp.float32)
    acc_ref[0] += contrib

    @pl.when(g == pl.num_programs(1) - 1)
    def _():
        o_ref[...] = acc_ref[...].astype(o_ref.dtype)


def _pool_ln_proj_kernel(x_ref, g_ref, b_ref, w_ref, bias_ref, o_ref, *, eps):
    """Final LayerNorm + projector, applied only to the pooled (B, D) tokens."""
    x = x_ref[...].astype(jnp.float32)
    mu = jnp.mean(x, axis=-1, keepdims=True)
    var = jnp.mean((x - mu) ** 2, axis=-1, keepdims=True)
    h = (x - mu) * lax.rsqrt(var + eps)
    h = h * g_ref[...].astype(jnp.float32) + b_ref[...].astype(jnp.float32)
    y = jnp.dot(h.astype(jnp.bfloat16), w_ref[...],
                preferred_element_type=jnp.float32)
    o_ref[...] = (y + bias_ref[...].astype(jnp.float32)).astype(o_ref.dtype)


# ----------------------------- helpers & wrappers ----------------------------- #

def _tile_m(m):
    """Largest multiple-of-8 row tile (<= _MAX_TM) that evenly divides m.

    The forward pass pads S to a multiple of 8, so m = B*S_padded is always a
    multiple of 8 and the 8-row divisor always exists (no unaligned fallback).
    """
    for t in (512, 256, 128, 64, 32, 16, 8):
        if t <= _MAX_TM and t <= m and m % t == 0:
            return t
    return m


def _heads_per_group(n_heads, dh):
    """Heads per attention grid step: aim for 128-lane-aligned Q/K/V slabs."""
    hg = max(1, 128 // dh)
    if hg >= n_heads or n_heads % hg != 0 or (3 * hg * dh) % 128 != 0:
        return n_heads                      # single group == full (lane-dense) width
    return hg


def _pack_qkv_grouped(wq, wk, wv, bq, bk, bv, n_heads, dh, hg):
    """Pack fused QKV columns in head-group order [Q_g | K_g | V_g] per group."""
    n_groups = n_heads // hg
    w_cols, b_cols = [], []
    for g in range(n_groups):
        lo, hi = g * hg * dh, (g + 1) * hg * dh
        w_cols += [wq[:, lo:hi], wk[:, lo:hi], wv[:, lo:hi]]
        b_cols += [bq[:, lo:hi], bk[:, lo:hi], bv[:, lo:hi]]
    return jnp.concatenate(w_cols, axis=1), jnp.concatenate(b_cols, axis=1)


def pallas_ln_linear(x, g, b, w, bias, eps=1e-5):
    """x: (M, D) bf16, gamma/beta: (1, D), w: (D, N) bf16, bias: (1, N) -> (M, N) bf16."""
    M, D = x.shape
    N = w.shape[1]
    tm = _tile_m(M)
    return pl.pallas_call(
        functools.partial(_ln_linear_kernel, eps=eps),
        out_shape=jax.ShapeDtypeStruct((M, N), jnp.bfloat16),
        grid=(M // tm,),
        in_specs=[
            pl.BlockSpec((tm, D), lambda i: (i, 0)),
            pl.BlockSpec((1, D), lambda i: (0, 0)),
            pl.BlockSpec((1, D), lambda i: (0, 0)),
            pl.BlockSpec((D, N), lambda i: (0, 0)),     # weight stays resident
            pl.BlockSpec((1, N), lambda i: (0, 0)),
        ],
        out_specs=pl.BlockSpec((tm, N), lambda i: (i, 0)),
        compiler_params=pltpu.CompilerParams(
            dimension_semantics=("parallel",),
            vmem_limit_bytes=_VMEM_LIMIT),
    )(x, g, b, w, bias)


def pallas_ln_mlp_residual(x, g, b, w1, b1, w2, b2, eps=1e-5):
    """Fused MLP block: (M, D) bf16 -> (M, D) bf16 with residual add."""
    M, D = x.shape
    H = w1.shape[1]
    tm = _tile_m(M)
    return pl.pallas_call(
        functools.partial(_ln_mlp_residual_kernel, eps=eps),
        out_shape=jax.ShapeDtypeStruct((M, D), jnp.bfloat16),
        grid=(M // tm,),
        in_specs=[
            pl.BlockSpec((tm, D), lambda i: (i, 0)),
            pl.BlockSpec((1, D), lambda i: (0, 0)),
            pl.BlockSpec((1, D), lambda i: (0, 0)),
            pl.BlockSpec((D, H), lambda i: (0, 0)),     # W1 resident
            pl.BlockSpec((1, H), lambda i: (0, 0)),
            pl.BlockSpec((H, D), lambda i: (0, 0)),     # W2 resident
            pl.BlockSpec((1, D), lambda i: (0, 0)),
        ],
        out_specs=pl.BlockSpec((tm, D), lambda i: (i, 0)),
        compiler_params=pltpu.CompilerParams(
            dimension_semantics=("parallel",),
            vmem_limit_bytes=_VMEM_LIMIT),
    )(x, g, b, w1, b1, w2, b2)


def pallas_attention_outproj(qkv, wo, bo, res, n_heads, dh, scale, heads_per_group):
    """qkv: (B, S, 3D) group-packed bf16; returns residual + attn @ Wo + bo, (B,S,D) bf16."""
    B, S, _ = qkv.shape
    D = n_heads * dh
    n_groups = n_heads // heads_per_group
    gw = 3 * heads_per_group * dh                      # QKV column-slab width per group
    rw = heads_per_group * dh                          # Wo row-slab height per group
    return pl.pallas_call(
        functools.partial(_attn_outproj_kernel, heads_per_group=heads_per_group,
                          dh=dh, scale=scale),
        out_shape=jax.ShapeDtypeStruct((B, S, D), jnp.bfloat16),
        grid=(B, n_groups),
        in_specs=[
            pl.BlockSpec((1, S, gw), lambda b, g: (b, 0, g)),
            pl.BlockSpec((rw, D), lambda b, g: (g, 0)),
            pl.BlockSpec((1, D), lambda b, g: (0, 0)),
            pl.BlockSpec((1, S, D), lambda b, g: (b, 0, 0)),
        ],
        out_specs=pl.BlockSpec((1, S, D), lambda b, g: (b, 0, 0)),
        scratch_shapes=[pltpu.VMEM((1, S, D), jnp.float32)],
        compiler_params=pltpu.CompilerParams(
            dimension_semantics=("parallel", "arbitrary"),
            vmem_limit_bytes=_VMEM_LIMIT),
    )(qkv, wo, bo, res)


def pallas_pool_ln_proj(x, g, b, w, bias, eps=1e-5):
    """x: (B, D) pooled tokens -> (B, proj_dim) f32."""
    B, D = x.shape
    P = w.shape[1]
    return pl.pallas_call(
        functools.partial(_pool_ln_proj_kernel, eps=eps),
        out_shape=jax.ShapeDtypeStruct((B, P), jnp.float32),
        grid=(1,),
        in_specs=[
            pl.BlockSpec((B, D), lambda i: (0, 0)),
            pl.BlockSpec((1, D), lambda i: (0, 0)),
            pl.BlockSpec((1, D), lambda i: (0, 0)),
            pl.BlockSpec((D, P), lambda i: (0, 0)),
            pl.BlockSpec((1, P), lambda i: (0, 0)),
        ],
        out_specs=pl.BlockSpec((B, P), lambda i: (0, 0)),
    )(x, g, b, w, bias)


# ----------------------------- Model definition ----------------------------- #

def init_params(key, vocab, max_seq, d_model, n_heads, d_mlp, n_layers, proj_dim):
    dh = d_model // n_heads
    hg = _heads_per_group(n_heads, dh)

    def nrm(k, shape, scale=0.02):
        return (jax.random.normal(k, shape, dtype=jnp.float32) * scale
                ).astype(jnp.bfloat16)                  # bf16 weights for the MXU

    keys = jax.random.split(key, 4 + n_layers)
    params = {
        # embeddings in bf16 (gather + add also done in bf16 -> half the HBM traffic)
        "tok_emb": nrm(keys[0], (vocab, d_model)),
        "pos_emb": nrm(keys[1], (max_seq, d_model)),
        "ln_f_g": jnp.ones((1, d_model), jnp.float32),
        "ln_f_b": jnp.zeros((1, d_model), jnp.float32),
        # projector (nn.Linear(hidden_size, projection_dim))
        "proj_w": nrm(keys[2], (d_model, proj_dim)),
        "proj_b": jnp.zeros((1, proj_dim), jnp.float32),
        "layers": [],
    }
    for l in range(n_layers):
        lk = jax.random.split(keys[4 + l], 8)
        wq = nrm(lk[0], (d_model, d_model))
        wk = nrm(lk[1], (d_model, d_model))
        wv = nrm(lk[2], (d_model, d_model))
        zb = jnp.zeros((1, d_model), jnp.float32)
        w_qkv, b_qkv = _pack_qkv_grouped(wq, wk, wv, zb, zb, zb, n_heads, dh, hg)
        params["layers"].append({
            "ln1_g": jnp.ones((1, d_model), jnp.float32),
            "ln1_b": jnp.zeros((1, d_model), jnp.float32),
            "w_qkv": w_qkv,                              # (D, 3D) head-group packed
            "b_qkv": b_qkv,                              # (1, 3D) head-group packed
            "wo": nrm(lk[3], (d_model, d_model)),
            "bo": jnp.zeros((1, d_model), jnp.float32),
            "ln2_g": jnp.ones((1, d_model), jnp.float32),
            "ln2_b": jnp.zeros((1, d_model), jnp.float32),
            "w1": nrm(lk[4], (d_model, d_mlp)),
            "b1": jnp.zeros((1, d_mlp), jnp.float32),
            "w2": nrm(lk[5], (d_mlp, d_model)),
            "b2": jnp.zeros((1, d_model), jnp.float32),
        })
    return params


def text_encoder_forward(token_ids, params, n_heads):
    """token_ids: (B, S) int32 -> (B, proj_dim) float32"""
    B, S = token_ids.shape
    d_model = params["tok_emb"].shape[1]
    dh = d_model // n_heads
    hg = _heads_per_group(n_heads, dh)
    scale = 1.0 / (dh ** 0.5)

    # Pad S to a multiple of 8 so every row/sequence tile is sublane-aligned.
    # Causal masking + position-0 pooling make trailing pad tokens irrelevant.
    pad_s = (-S) % 8
    if pad_s:
        token_ids = jnp.pad(token_ids, ((0, 0), (0, pad_s)))
    Sp = S + pad_s

    # Embedding lookup (plain JAX gather) entirely in bf16.
    x = jnp.take(params["tok_emb"], token_ids, axis=0) + params["pos_emb"][:Sp][None]
    x2 = x.reshape(B * Sp, d_model)                                    # (B*Sp, D) bf16

    for layer in params["layers"]:
        # --- self-attention block (pre-LN): fused LN1 -> QKV (head-group packed) ---
        qkv = pallas_ln_linear(x2, layer["ln1_g"], layer["ln1_b"],
                               layer["w_qkv"], layer["b_qkv"])         # (B*Sp, 3D)
        # attention + out-proj + residual fused; grid (B, n_head_groups)
        x3 = pallas_attention_outproj(qkv.reshape(B, Sp, 3 * d_model),
                                      layer["wo"], layer["bo"],
                                      x2.reshape(B, Sp, d_model),
                                      n_heads, dh, scale, hg)          # (B, Sp, D)
        x2 = x3.reshape(B * Sp, d_model)

        # --- MLP block fully fused: LN2 -> W1 -> quick-gelu -> W2 -> +residual ---
        x2 = pallas_ln_mlp_residual(x2, layer["ln2_g"], layer["ln2_b"],
                                    layer["w1"], layer["b1"],
                                    layer["w2"], layer["b2"])

    # Pooling first (clip-vit branch of the reference: last_hidden_state[:, 0, :]),
    # then final layernorm + projector on only the (B, D) pooled rows.
    pooled = x2.reshape(B, Sp, d_model)[:, 0, :]                       # (B, D)
    out = pallas_pool_ln_proj(pooled, params["ln_f_g"], params["ln_f_b"],
                              params["proj_w"], params["proj_b"])
    return out                                                         # (B, proj_dim) f32


# ----------------------------------- main ----------------------------------- #

if __name__ == "__main__":
    # Small deterministic configuration.
    B, S = 2, 8           # batch of 2 "sentences", 8 tokens each
    VOCAB = 64
    D_MODEL = 32
    N_HEADS = 4
    D_MLP = 64
    N_LAYERS = 2
    PROJ_DIM = 16
    MAX_SEQ = 16

    key = jax.random.PRNGKey(0)
    k_tok, k_params = jax.random.split(key)

    # Synthetic "tokenized" input (stands in for the HF tokenizer output).
    token_ids = jax.random.randint(k_tok, (B, S), 0, VOCAB, dtype=jnp.int32)

    params = init_params(k_params, VOCAB, MAX_SEQ, D_MODEL, N_HEADS, D_MLP,
                         N_LAYERS, PROJ_DIM)

    out = text_encoder_forward(token_ids, params, N_HEADS)
    out = jax.block_until_ready(out)

    assert out.shape == (B, PROJ_DIM), out.shape
    assert out.dtype == jnp.float32
    assert bool(jnp.all(jnp.isfinite(out)))
    print("KERNEL_OK")
</pallas_src>

<mosaic_0001>
module attributes {stable_mosaic.version = 11 : i64} {
  func.func @_ln_linear_kernel(%arg0: i32, %arg1: memref<16x32xbf16, #tpu.memory_space<vmem>>, %arg2: memref<1x32xf32, #tpu.memory_space<vmem>>, %arg3: memref<1x32xf32, #tpu.memory_space<vmem>>, %arg4: memref<32x96xbf16, #tpu.memory_space<vmem>>, %arg5: memref<1x96xf32, #tpu.memory_space<vmem>>, %arg6: memref<16x96xbf16, #tpu.memory_space<vmem>>) attributes {dimension_semantics = [#tpu.dimension_semantics<parallel>], iteration_bounds = array<i64: 1>, scalar_prefetch = 0 : i64, scratch_operands = 0 : i64, tpu.core_type = #tpu.core_type<tc>, window_params = [{transform_indices = @transform_0, window_bounds = array<i64: 16, 32>}, {pipeline_mode = #tpu.pipeline_mode<synchronous>, transform_indices = @transform_1, window_bounds = array<i64: 1, 32>}, {pipeline_mode = #tpu.pipeline_mode<synchronous>, transform_indices = @transform_2, window_bounds = array<i64: 1, 32>}, {pipeline_mode = #tpu.pipeline_mode<synchronous>, transform_indices = @transform_3, window_bounds = array<i64: 32, 96>}, {pipeline_mode = #tpu.pipeline_mode<synchronous>, transform_indices = @transform_4, window_bounds = array<i64: 1, 96>}, {transform_indices = @transform_5, window_bounds = array<i64: 16, 96>}]} {
    %c0 = arith.constant 0 : index
    %c0_0 = arith.constant 0 : index
    %0 = vector.load %arg1[%c0, %c0_0] : memref<16x32xbf16, #tpu.memory_space<vmem>>, vector<16x32xbf16>
    %1 = arith.extf %0 : vector<16x32xbf16> to vector<16x32xf32>
    %cst = arith.constant dense<0.000000e+00> : vector<16xf32>
    %2 = vector.multi_reduction <add>, %1, %cst [1] : vector<16x32xf32> to vector<16xf32>
    %3 = vector.shape_cast %2 : vector<16xf32> to vector<16x1xf32>
    %cst_1 = arith.constant 3.200000e+01 : f32
    %4 = vector.broadcast %cst_1 : f32 to vector<16x1xf32>
    %5 = arith.divf %3, %4 : vector<16x1xf32>
    %6 = vector.broadcast %5 : vector<16x1xf32> to vector<16x32xf32>
    %7 = arith.subf %1, %6 : vector<16x32xf32>
    %8 = arith.mulf %7, %7 : vector<16x32xf32>
    %cst_2 = arith.constant dense<0.000000e+00> : vector<16xf32>
    %9 = vector.multi_reduction <add>, %8, %cst_2 [1] : vector<16x32xf32> to vector<16xf32>
    %10 = vector.shape_cast %9 : vector<16xf32> to vector<16x1xf32>
    %cst_3 = arith.constant 3.200000e+01 : f32
    %11 = vector.broadcast %cst_3 : f32 to vector<16x1xf32>
    %12 = arith.divf %10, %11 : vector<16x1xf32>
    %13 = vector.broadcast %5 : vector<16x1xf32> to vector<16x32xf32>
    %14 = arith.subf %1, %13 : vector<16x32xf32>
    %cst_4 = arith.constant 9.99999974E-6 : f32
    %15 = vector.broadcast %cst_4 : f32 to vector<16x1xf32>
    %16 = arith.addf %12, %15 : vector<16x1xf32>
    %17 = math.rsqrt %16 : vector<16x1xf32>
    %18 = vector.broadcast %17 : vector<16x1xf32> to vector<16x32xf32>
    %19 = arith.mulf %14, %18 : vector<16x32xf32>
    %c0_5 = arith.constant 0 : index
    %c0_6 = arith.constant 0 : index
    %20 = vector.load %arg2[%c0_5, %c0_6] : memref<1x32xf32, #tpu.memory_space<vmem>>, vector<1x32xf32>
    %21 = vector.broadcast %20 : vector<1x32xf32> to vector<16x32xf32>
    %22 = arith.mulf %19, %21 : vector<16x32xf32>
    %c0_7 = arith.constant 0 : index
    %c0_8 = arith.constant 0 : index
    %23 = vector.load %arg3[%c0_7, %c0_8] : memref<1x32xf32, #tpu.memory_space<vmem>>, vector<1x32xf32>
    %24 = vector.broadcast %23 : vector<1x32xf32> to vector<16x32xf32>
    %25 = arith.addf %22, %24 : vector<16x32xf32>
    %26 = arith.truncf %25 : vector<16x32xf32> to vector<16x32xbf16>
    %c0_9 = arith.constant 0 : index
    %c0_10 = arith.constant 0 : index
    %27 = vector.load %arg4[%c0_9, %c0_10] : memref<32x96xbf16, #tpu.memory_space<vmem>>, vector<32x96xbf16>
    %cst_11 = arith.constant dense<0.000000e+00> : vector<16x96xf32>
    %28 = tpu.matmul %26, %27, %cst_11 {dimension_numbers = #tpu.dot_dimension_numbers<[1], [0], [0], [1], [0, 0, 1, 1], [], []>} : vector<16x32xbf16>, vector<32x96xbf16>, vector<16x96xf32> -> vector<16x96xf32>
    %c0_12 = arith.constant 0 : index
    %c0_13 = arith.constant 0 : index
    %29 = vector.load %arg5[%c0_12, %c0_13] : memref<1x96xf32, #tpu.memory_space<vmem>>, vector<1x96xf32>
    %30 = vector.broadcast %29 : vector<1x96xf32> to vector<16x96xf32>
    %31 = arith.addf %28, %30 : vector<16x96xf32>
    %32 = arith.truncf %31 : vector<16x96xf32> to vector<16x96xbf16>
    %c0_14 = arith.constant 0 : index
    %c0_15 = arith.constant 0 : index
    %33 = vector.load %arg6[%c0_14, %c0_15] : memref<16x96xbf16, #tpu.memory_space<vmem>>, vector<16x96xbf16>
    tpu.vector_store %arg6[%c0_14, %c0_15], %32 {strides = array<i32>} : memref<16x96xbf16, #tpu.memory_space<vmem>>, vector<16x96xbf16>,
    return
  }
  func.func @transform_0(%arg0: i32) -> (i32, i32) {
    %c0_i32 = arith.constant 0 : i32
    %c0_i32_0 = arith.constant 0 : i32
    return %arg0, %c0_i32 : i32, i32
  }
  func.func @transform_1(%arg0: i32) -> (i32, i32) {
    %c0_i32 = arith.constant 0 : i32
    %c0_i32_0 = arith.constant 0 : i32
    %c0_i32_1 = arith.constant 0 : i32
    return %c0_i32, %c0_i32_0 : i32, i32
  }
  func.func @transform_2(%arg0: i32) -> (i32, i32) {
    %c0_i32 = arith.constant 0 : i32
    %c0_i32_0 = arith.constant 0 : i32
    %c0_i32_1 = arith.constant 0 : i32
    return %c0_i32, %c0_i32_0 : i32, i32
  }
  func.func @transform_3(%arg0: i32) -> (i32, i32) {
    %c0_i32 = arith.constant 0 : i32
    %c0_i32_0 = arith.constant 0 : i32
    %c0_i32_1 = arith.constant 0 : i32
    return %c0_i32, %c0_i32_0 : i32, i32
  }
  func.func @transform_4(%arg0: i32) -> (i32, i32) {
    %c0_i32 = arith.constant 0 : i32
    %c0_i32_0 = arith.constant 0 : i32
    %c0_i32_1 = arith.constant 0 : i32
    return %c0_i32, %c0_i32_0 : i32, i32
  }
  func.func @transform_5(%arg0: i32) -> (i32, i32) {
    %c0_i32 = arith.constant 0 : i32
    %c0_i32_0 = arith.constant 0 : i32
    return %arg0, %c0_i32 : i32, i32
  }
}

</mosaic_0001>

<llo_original>
// kernel: tpu_custom_call.1
$region0: #{tpu_custom_call.1}
  #allocation0 [shape = 'u32[]', space=smem, size = 0x4, offset = 0x4, fixed_abs, tag = 'smem constant byte address 0x4 - core index']
  #allocation1 [shape = 'u32[144,128]{1,0:T(1,128)}', space=vmem, size = 0x12000, scoped, tag = 'internal scratch']
  %s0 = inlined_call_operand.hbm [shape: bf16[16,32], index: 0, kind: input, shape index: {}]
  %s1 = inlined_call_operand.vmem [shape: f32[1,32], index: 1, kind: input, shape index: {}]
  %s2 = inlined_call_operand.vmem [shape: f32[1,32], index: 2, kind: input, shape index: {}]
  %s3 = inlined_call_operand.hbm [shape: bf16[32,96], index: 3, kind: input, shape index: {}]
  %s4 = inlined_call_operand.vmem [shape: f32[1,96], index: 4, kind: input, shape index: {}]
  %s5 = inlined_call_operand.hbm [shape: bf16[16,96], index: 5, kind: output, shape index: {}]
  %s6 = sld [smem:[#allocation0]]
  $region38: #{tpu_custom_call.1} parent=0
    _
  %s8 = ssub.s32 1, %s6
  %s9 = scalar_select 0, %s8, %s6
  $region1: #{tpu_custom_call.1} parent=0
    #allocation2 [shape = 'u8[4096]{0}', space=vmem, size = 0x1000, scoped, tag = 'input window, operand 0, single buffered']
    #allocation3 [shape = 's32[1]{0}', space=sflag, size = 0x4, scoped, tag = 'scoped memory for tpu_custom_call.1']
    #allocation4 [shape = 's32[1]{0}', space=sflag, size = 0x4, scoped, tag = 'scoped memory for tpu_custom_call.1']
    #allocation5 [shape = 'u8[8192]{0}', space=vmem, size = 0x2000, scoped, tag = 'input window, operand 3, single buffered']
    #allocation6 [shape = 's32[1]{0}', space=sflag, size = 0x4, scoped, tag = 'scoped memory for tpu_custom_call.1']
    #allocation7 [shape = 'u8[4096]{0}', space=vmem, size = 0x1000, scoped, tag = 'output window, operand 0, single buffered']
    %10 = vsyncpa [#allocation3], 0
    %11 = vsyncpa [#allocation6], 0
    %12 = vsyncpa [#allocation4], 0
    // Predicated region
    $region2: #{tpu_custom_call.1} parent=1 // pred_check
      _
    $region3: #{tpu_custom_call.1} parent=1 // pred_check_branch
      %14 = sbr.rel (0) target = $region5
    $region4: #{tpu_custom_call.1} parent=1 // pred_region
      %s16 = ssub.s32 128, 128
      %17 = vsyncadd [#allocation3], %s16
      %s18 = sshll.u32 [#allocation2], 4
      %s19 = int_to_ptr.vmem [resolvable:$true] %s18
      %24 = dma.hbm_to_vmem [thread:$0]  %s0, 128, %s19, [#allocation3], 64, 64, 4
    $region5: #{tpu_custom_call.1} parent=1 // pred_fallthru
      _
    // Predicated region
    $region6: #{tpu_custom_call.1} parent=1 // pred_check
      _
    $region7: #{tpu_custom_call.1} parent=1 // pred_check_branch
      %26 = sbr.rel (0) target = $region9
    $region8: #{tpu_custom_call.1} parent=1 // pred_region
      _
    $region9: #{tpu_custom_call.1} parent=1 // pred_fallthru
      _
    // Predicated region
    $region10: #{tpu_custom_call.1} parent=1 // pred_check
      _
    $region11: #{tpu_custom_call.1} parent=1 // pred_check_branch
      %28 = sbr.rel (0) target = $region13
    $region12: #{tpu_custom_call.1} parent=1 // pred_region
      _
    $region13: #{tpu_custom_call.1} parent=1 // pred_fallthru
      _
    // Predicated region
    $region14: #{tpu_custom_call.1} parent=1 // pred_check
      _
    $region15: #{tpu_custom_call.1} parent=1 // pred_check_branch
      %30 = sbr.rel (0) target = $region17
    $region16: #{tpu_custom_call.1} parent=1 // pred_region
      %s32 = ssub.s32 256, 256
      %33 = vsyncadd [#allocation6], %s32
      %s34 = sshll.u32 [#allocation5], 4
      %s35 = int_to_ptr.vmem [resolvable:$true] %s34
      %40 = dma.hbm_to_vmem [thread:$0]  %s3, 256, %s35, [#allocation6], 64, 64, 4
    $region17: #{tpu_custom_call.1} parent=1 // pred_fallthru
      _
    // Predicated region
    $region18: #{tpu_custom_call.1} parent=1 // pred_check
      _
    $region19: #{tpu_custom_call.1} parent=1 // pred_check_branch
      %42 = sbr.rel (0) target = $region21
    $region20: #{tpu_custom_call.1} parent=1 // pred_region
      _
    $region21: #{tpu_custom_call.1} parent=1 // pred_fallthru
      _
    // Predicated region
    $region22: #{tpu_custom_call.1} parent=1 // pred_check
      _
    $region23: #{tpu_custom_call.1} parent=1 // pred_check_branch
      %44 = sbr.rel (0) target = $region25
    $region24: #{tpu_custom_call.1} parent=1 // pred_region
      %45 = dma.done [#allocation3], 128
    $region25: #{tpu_custom_call.1} parent=1 // pred_fallthru
      _
    // Predicated region
    $region26: #{tpu_custom_call.1} parent=1 // pred_check
      _
    $region27: #{tpu_custom_call.1} parent=1 // pred_check_branch
      %47 = sbr.rel (0) target = $region29
    $region28: #{tpu_custom_call.1} parent=1 // pred_region
      %48 = dma.done [#allocation6], 256
    $region29: #{tpu_custom_call.1} parent=1 // pred_fallthru
      _
    %v50 = vld [vmem:[#allocation2] sm:$0xf]
    %v51 = vld [vmem:[#allocation2 + $0x4] sm:$0xf]
    %v52 = vunpack.c.l.bf16 %v50
    %v53 = vunpack.c.l.bf16 %v51
    %vm54 = vcmask 261120
    %v55 = vsel %vm54, %v52, 0.0
    %56 = vadd.xlane.f32.xlu0 %v55
    %v57 = vpop.xlane.xlu0 %56
    %v58 = vsel %vm54, %v53, 0.0
    %59 = vadd.xlane.f32.xlu0 %v58
    %v60 = vpop.xlane.xlu0 %59
    %v61 = vrcp.pop 32.0
    %v62 = vmul.f32 %v57, %v61
    %v63 = vmul.f32 %v60, %v61
    %v64 = vsub.f32 %v52, %v62
    %v65 = vsub.f32 %v53, %v63
    %v66 = vmul.f32 %v64, %v64
    %v67 = vmul.f32 %v65, %v65
    %v68 = vsel %vm54, %v66, 0.0
    %69 = vadd.xlane.f32.xlu0 %v68
    %v70 = vpop.xlane.xlu0 %69
    %v71 = vsel %vm54, %v67, 0.0
    %72 = vadd.xlane.f32.xlu0 %v71
    %v73 = vpop.xlane.xlu0 %72
    %v74 = vmul.f32 %v70, %v61
    %v75 = vmul.f32 %v73, %v61
    %v76 = vadd.f32 %v74, 1e-05
    %v77 = vadd.f32 %v75, 1e-05
    %v78 = vrsqrt.pop %v76
    %v79 = vrsqrt.pop %v77
    %v80 = vmul.f32 %v64, %v78
    %v81 = vmul.f32 %v65, %v79
    %v82 = vld [vmem:[%s1] sm:$0x1]
    %v84 = vlaneseq
    %v85 = vshrl.u32 %v84, 7
    %v86 = vsub.s32 0, %v85
    %v87 = vrot.slane %v82, %v86
    %v89 = vmul.f32 %v80, %v87
    %v90 = vmul.f32 %v81, %v87
    %v91 = vld [vmem:[%s2] sm:$0x1]
    %v93 = vlaneseq
    %v94 = vshrl.u32 %v93, 7
    %v95 = vsub.s32 0, %v94
    %v96 = vrot.slane %v91, %v95
    %v98 = vadd.f32 %v89, %v96
    %v99 = vadd.f32 %v90, %v96
    %v100 = vpack.c.bf16 %v99, %v98
    %v101 = vld [vmem:[#allocation5] sm:$0xf]
    %v102 = vld [vmem:[#allocation5 + $0x4] sm:$0xf]
    %v103 = vld [vmem:[#allocation5 + $0x8] sm:$0xf]
    %v104 = vld [vmem:[#allocation5 + $0xc] sm:$0xf]
    %v105 = vld [vmem:[%s4] sm:$0x1]
    %v107 = vlaneseq
    %v108 = vshrl.u32 %v107, 7
    %v109 = vsub.s32 0, %v108
    %v110 = vrot.slane %v105, %v109
    %v116 = vunpack.c.l.b16 %v101
    %v117 = vunpack.c.l.b16 %v102
    %v118 = vunpack.c.l.b16 %v103
    %v119 = vunpack.c.l.b16 %v104
    %v120 = vpack.c.b16 %v117, %v116
    %v121 = vpack.c.b16 %v119, %v118
    %v125 = vsel %vm54, %v100, 0
    %127 = vmatprep.subr.bf16.mxu0 0
    %128 = vmatpush1.bf16.msra.mxu0 0
    %129 = vmatprep.subr.bf16.mxu0 0
    %130 = vmatpush1.bf16.msra.mxu0 0
    %131 = vmatprep.subr.bf16.mxu0 0
    %132 = vmatpush1.bf16.msra.mxu0 0
    %133 = vmatprep.subr.bf16.mxu0 0
    %134 = vmatpush1.bf16.msra.mxu0 0
    %135 = vmatprep.subr.bf16.mxu0 0
    %136 = vmatpush1.bf16.msra.mxu0 0
    %137 = vmatprep.subr.bf16.mxu0 0
    %138 = vmatpush1.bf16.msra.mxu0 0
    %139 = vmatprep.subr.bf16.mxu0 0
    %140 = vmatpush1.bf16.msra.mxu0 %v121
    %141 = vmatprep.subr.bf16.mxu0 0
    %142 = vmatpush1.bf16.msra.mxu0 %v120
    %143 = vmatprep.subr.bf16.mxu0 0
    %144 = vmatpush2.bf16.msra.mxu0 0
    %145 = vmatprep.subr.bf16.mxu0 0
    %146 = vmatpush2.bf16.msra.mxu0 0
    %147 = vmatprep.subr.bf16.mxu0 0
    %148 = vmatpush2.bf16.msra.mxu0 0
    %149 = vmatprep.subr.bf16.mxu0 0
    %150 = vmatpush2.bf16.msra.mxu0 0
    %151 = vmatprep.subr.bf16.mxu0 0
    %152 = vmatpush2.bf16.msra.mxu0 0
    %153 = vmatprep.subr.bf16.mxu0 0
    %154 = vmatpush2.bf16.msra.mxu0 0
    %155 = vmatprep.subr.bf16.mxu0 0
    %156 = vmatpush2.bf16.msra.mxu0 0
    %157 = vmatprep.subr.bf16.mxu0 0
    %158 = vmatpush2.bf16.msra.mxu0 0
    %159 = vmatprep.mubr.bf16.mxu0 0
    %160 = vmatmul.mubr.bf16.gmra.mxu0 %v125
    %v161 = vpop.f32.mrf.mxu0
    %v162 = vadd.f32 %v110, %v161
    %v163 = vpop.f32.mrf.mxu0
    %v164 = vpop.f32.mrf.mxu0
    %v165 = vadd.f32 %v110, %v164
    %v166 = vpop.f32.mrf.mxu0
    %167 = vdwg.mxu0
    %v168 = vpack.c.bf16 %v165, %v162
    %v170 = vunpack.c.l.b16 %v168
    %v171 = vunpack.c.h.b16 %v168
    %v172 = vpack.c.b16 %v170, %v170
    %v173 = vpack.c.b16 %v171, %v171
    %vm176 = vcmask 781312
    %177 = vst.msk [vmem:[#allocation7] sm:$0xf] %vm176, %v172
    %178 = vst.msk [vmem:[#allocation7 + $0x4] sm:$0xf] %vm176, %v173
    // Predicated region
    $region30: #{tpu_custom_call.1} parent=1 // pred_check
      _
    $region31: #{tpu_custom_call.1} parent=1 // pred_check_branch
      %180 = sbr.rel (0) target = $region33
    $region32: #{tpu_custom_call.1} parent=1 // pred_region
      %s182 = ssub.s32 128, 128
      %183 = vsyncadd [#allocation4], %s182
      %s184 = sshll.u32 [#allocation7], 4
      %s185 = int_to_ptr.vmem [resolvable:$true] %s184
      %190 = dma.vmem_to_hbm [thread:$0]  %s185, 128, %s5, [#allocation4], 64, 64, 4
    $region33: #{tpu_custom_call.1} parent=1 // pred_fallthru
      _
    // Predicated region
    $region34: #{tpu_custom_call.1} parent=1 // pred_check
      _
    $region35: #{tpu_custom_call.1} parent=1 // pred_check_branch
      %192 = sbr.rel (0) target = $region37
    $region36: #{tpu_custom_call.1} parent=1 // pred_region
      %193 = dma.done [#allocation4], 128
    $region37: #{tpu_custom_call.1} parent=1 // pred_fallthru
      _
    %194 = vsyncpa [#allocation3], 1
    %195 = vsyncpa [#allocation6], 1
    %196 = vsyncpa [#allocation4], 1

</llo_original>
